<compile_context>
chip_gen: v5e
topology: v5e:2x2
jax: 0.10.0
libtpu: 0.0.40
codegen_flags: <defaults>
</compile_context>

<pallas_src>
import math
import functools

import jax
import jax.numpy as jnp
from jax.experimental import pallas as pl
from jax.experimental.pallas import tpu as pltpu


_GELU_C = math.sqrt(2.0 / math.pi)


def mlp_kernel(x_ref, w_fc_ref, b_fc_ref, w_proj_ref, b_proj_ref, o_ref, acc_ref):
    """One (row_tile, hidden_tile) grid step of the fused MLP."""
    j = pl.program_id(1)

    @pl.when(j == 0)
    def _init():
        acc_ref[...] = jnp.zeros_like(acc_ref)

    # c_fc panel: (tm, C) @ (C, th) -> (tm, th), f32 accumulation on the MXU.
    h = jnp.dot(x_ref[...], w_fc_ref[...], preferred_element_type=jnp.float32)
    h = h + b_fc_ref[...].astype(jnp.float32)

    # GELU, tanh approximation (matches torch.nn.GELU(approximate='tanh')), f32.
    h = 0.5 * h * (1.0 + jnp.tanh(_GELU_C * (h + 0.044715 * h * h * h)))

    # c_proj panel contribution: (tm, th) @ (th, C) -> (tm, C), accumulate in f32.
    acc_ref[...] += jnp.dot(h.astype(w_proj_ref.dtype), w_proj_ref[...],
                            preferred_element_type=jnp.float32)

    @pl.when(j == pl.num_programs(1) - 1)
    def _finalize():
        out = acc_ref[...] + b_proj_ref[...].astype(jnp.float32)
        o_ref[...] = out.astype(o_ref.dtype)


def _round_up(x, m):
    return ((x + m - 1) // m) * m


def mlp_forward(x, w_fc, b_fc, w_proj, b_proj, *, block_rows=256, block_hidden=512):
    """Fused MLP forward: gelu_tanh(x @ w_fc + b_fc) @ w_proj + b_proj.

    x:      (B, T, C)
    w_fc:   (C, H)   with H = 4*C (PyTorch weight pre-transposed)
    b_fc:   (H,)
    w_proj: (H, C)
    b_proj: (C,)
    """
    B, T, C = x.shape
    H = w_fc.shape[1]
    assert w_fc.shape == (C, H) and w_proj.shape == (H, C)
    assert block_rows % 8 == 0

    M = B * T
    xf = x.reshape(M, C)

    # Row tile: multiple of 8 sublanes; pad rows with zeros if needed.
    tm = min(block_rows, _round_up(M, 8))
    M_pad = _round_up(M, tm)
    if M_pad != M:
        xf = jnp.pad(xf, ((0, M_pad - M), (0, 0)))

    # Hidden tile: a multiple of 128 lanes that evenly divides H, else whole H.
    th = min(block_hidden, H)
    if not (th % 128 == 0 and H % th == 0):
        th = H

    b_fc2 = b_fc.reshape(1, H)
    b_proj2 = b_proj.reshape(1, C)

    grid = (M_pad // tm, H // th)

    out = pl.pallas_call(
        mlp_kernel,
        out_shape=jax.ShapeDtypeStruct((M_pad, C), x.dtype),
        grid=grid,
        in_specs=[
            pl.BlockSpec((tm, C), lambda i, j: (i, 0)),    # x row tile
            pl.BlockSpec((C, th), lambda i, j: (0, j)),    # c_fc weight panel
            pl.BlockSpec((1, th), lambda i, j: (0, j)),    # c_fc bias panel
            pl.BlockSpec((th, C), lambda i, j: (j, 0)),    # c_proj weight panel
            pl.BlockSpec((1, C), lambda i, j: (0, 0)),     # c_proj bias
        ],
        out_specs=pl.BlockSpec((tm, C), lambda i, j: (i, 0)),
        scratch_shapes=[pltpu.VMEM((tm, C), jnp.float32)],
        compiler_params=pltpu.CompilerParams(
            dimension_semantics=("parallel", "arbitrary")),
    )(xf, w_fc, b_fc2, w_proj, b_proj2)

    return out[:M].reshape(B, T, C)


def reference_mlp(x, w_fc, b_fc, w_proj, b_proj):
    """Pure-JAX reference mirroring the PyTorch MLP forward pass."""
    h = x @ w_fc + b_fc
    h = 0.5 * h * (1.0 + jnp.tanh(_GELU_C * (h + 0.044715 * h ** 3)))
    return h @ w_proj + b_proj


def _make_params(key, C, H, dtype=jnp.float32):
    kw1, kb1, kw2, kb2 = jax.random.split(key, 4)
    bound1 = 1.0 / math.sqrt(C)
    bound2 = 1.0 / math.sqrt(H)
    w_fc = jax.random.uniform(kw1, (C, H), dtype, -bound1, bound1)
    b_fc = jax.random.uniform(kb1, (H,), dtype, -bound1, bound1)
    w_proj = jax.random.uniform(kw2, (H, C), dtype, -bound2, bound2)
    b_proj = jax.random.uniform(kb2, (C,), dtype, -bound2, bound2)
    return w_fc, b_fc, w_proj, b_proj


if __name__ == "__main__":
    key = jax.random.PRNGKey(0)

    # Case 1: module-spec shapes (n_embed=32 -> hidden=128), single tile.
    B, T, C = 2, 8, 32
    k1, k2, key = jax.random.split(key, 3)
    x = jax.random.normal(k1, (B, T, C), dtype=jnp.float32)
    w_fc, b_fc, w_proj, b_proj = _make_params(k2, C, 4 * C)

    y = mlp_forward(x, w_fc, b_fc, w_proj, b_proj, block_rows=8)
    y = jax.block_until_ready(y)
    y_ref = reference_mlp(x, w_fc, b_fc, w_proj, b_proj)
    assert y.shape == (B, T, C)
    assert jnp.allclose(y, y_ref, atol=1e-5, rtol=1e-5), "case 1 mismatch"

    # Case 2: exercises both grid axes (row tiles and hidden-dim accumulation).
    B2, T2, C2 = 2, 16, 64
    k3, k4 = jax.random.split(key, 2)
    x2 = jax.random.normal(k3, (B2, T2, C2), dtype=jnp.float32)
    w_fc2, b_fc2, w_proj2, b_proj2 = _make_params(k4, C2, 4 * C2)

    y2 = mlp_forward(x2, w_fc2, b_fc2, w_proj2, b_proj2,
                     block_rows=8, block_hidden=128)
    y2 = jax.block_until_ready(y2)
    y2_ref = reference_mlp(x2, w_fc2, b_fc2, w_proj2, b_proj2)
    assert y2.shape == (B2, T2, C2)
    assert jnp.allclose(y2, y2_ref, atol=1e-5, rtol=1e-5), "case 2 mismatch"

    print("KERNEL_OK")
</pallas_src>

<mosaic_0001>
module attributes {stable_mosaic.version = 11 : i64} {
  func.func @mlp_kernel(%arg0: i32, %arg1: i32, %arg2: memref<8x32xf32, #tpu.memory_space<vmem>>, %arg3: memref<32x128xf32, #tpu.memory_space<vmem>>, %arg4: memref<1x128xf32, #tpu.memory_space<vmem>>, %arg5: memref<128x32xf32, #tpu.memory_space<vmem>>, %arg6: memref<1x32xf32, #tpu.memory_space<vmem>>, %arg7: memref<8x32xf32, #tpu.memory_space<vmem>>, %arg8: memref<8x32xf32, #tpu.memory_space<vmem>>) attributes {dimension_semantics = [#tpu.dimension_semantics<parallel>, #tpu.dimension_semantics<arbitrary>], iteration_bounds = array<i64: 2, 1>, scalar_prefetch = 0 : i64, scratch_operands = 1 : i64, tpu.core_type = #tpu.core_type<tc>, window_params = [{transform_indices = @transform_0, window_bounds = array<i64: 8, 32>}, {transform_indices = @transform_1, window_bounds = array<i64: 32, 128>}, {transform_indices = @transform_2, window_bounds = array<i64: 1, 128>}, {transform_indices = @transform_3, window_bounds = array<i64: 128, 32>}, {pipeline_mode = #tpu.pipeline_mode<synchronous>, transform_indices = @transform_4, window_bounds = array<i64: 1, 32>}, {transform_indices = @transform_5, window_bounds = array<i64: 8, 32>}]} {
    %c0_i32 = arith.constant 0 : i32
    %0 = arith.cmpi eq, %arg1, %c0_i32 : i32
    %1 = arith.extui %0 : i1 to i32
    %c0_i32_0 = arith.constant 0 : i32
    %2 = arith.cmpi ne, %1, %c0_i32_0 : i32
    scf.if %2 {
      %cst_19 = arith.constant 0.000000e+00 : f32
      %30 = vector.broadcast %cst_19 : f32 to vector<8x32xf32>
      %c0_20 = arith.constant 0 : index
      %c0_21 = arith.constant 0 : index
      %31 = vector.load %arg8[%c0_20, %c0_21] : memref<8x32xf32, #tpu.memory_space<vmem>>, vector<8x32xf32>
      tpu.vector_store %arg8[%c0_20, %c0_21], %30 {strides = array<i32>} : memref<8x32xf32, #tpu.memory_space<vmem>>, vector<8x32xf32>,
    } else {
    }
    %c0 = arith.constant 0 : index
    %c0_1 = arith.constant 0 : index
    %3 = vector.load %arg2[%c0, %c0_1] : memref<8x32xf32, #tpu.memory_space<vmem>>, vector<8x32xf32>
    %c0_2 = arith.constant 0 : index
    %c0_3 = arith.constant 0 : index
    %4 = vector.load %arg3[%c0_2, %c0_3] : memref<32x128xf32, #tpu.memory_space<vmem>>, vector<32x128xf32>
    %cst = arith.constant dense<0.000000e+00> : vector<8x128xf32>
    %5 = tpu.matmul %3, %4, %cst {dimension_numbers = #tpu.dot_dimension_numbers<[1], [0], [0], [1], [0, 0, 1, 1], [], []>} : vector<8x32xf32>, vector<32x128xf32>, vector<8x128xf32> -> vector<8x128xf32>
    %c0_4 = arith.constant 0 : index
    %c0_5 = arith.constant 0 : index
    %6 = vector.load %arg4[%c0_4, %c0_5] : memref<1x128xf32, #tpu.memory_space<vmem>>, vector<1x128xf32>
    %7 = vector.broadcast %6 : vector<1x128xf32> to vector<8x128xf32>
    %8 = arith.addf %5, %7 : vector<8x128xf32>
    %cst_6 = arith.constant 5.000000e-01 : f32
    %9 = vector.broadcast %cst_6 : f32 to vector<8x128xf32>
    %10 = arith.mulf %9, %8 : vector<8x128xf32>
    %cst_7 = arith.constant 4.471500e-02 : f32
    %11 = vector.broadcast %cst_7 : f32 to vector<8x128xf32>
    %12 = arith.mulf %11, %8 : vector<8x128xf32>
    %13 = arith.mulf %12, %8 : vector<8x128xf32>
    %14 = arith.mulf %13, %8 : vector<8x128xf32>
    %15 = arith.addf %8, %14 : vector<8x128xf32>
    %cst_8 = arith.constant 0.797884583 : f32
    %16 = vector.broadcast %cst_8 : f32 to vector<8x128xf32>
    %17 = arith.mulf %16, %15 : vector<8x128xf32>
    %18 = math.tanh %17 : vector<8x128xf32>
    %cst_9 = arith.constant 1.000000e+00 : f32
    %19 = vector.broadcast %cst_9 : f32 to vector<8x128xf32>
    %20 = arith.addf %19, %18 : vector<8x128xf32>
    %21 = arith.mulf %10, %20 : vector<8x128xf32>
    %c0_10 = arith.constant 0 : index
    %c0_11 = arith.constant 0 : index
    %22 = vector.load %arg8[%c0_10, %c0_11] : memref<8x32xf32, #tpu.memory_space<vmem>>, vector<8x32xf32>
    %c0_12 = arith.constant 0 : index
    %c0_13 = arith.constant 0 : index
    %23 = vector.load %arg5[%c0_12, %c0_13] : memref<128x32xf32, #tpu.memory_space<vmem>>, vector<128x32xf32>
    %cst_14 = arith.constant dense<0.000000e+00> : vector<8x32xf32>
    %24 = tpu.matmul %21, %23, %cst_14 {dimension_numbers = #tpu.dot_dimension_numbers<[1], [0], [0], [1], [0, 0, 1, 1], [], []>} : vector<8x128xf32>, vector<128x32xf32>, vector<8x32xf32> -> vector<8x32xf32>
    %25 = arith.addf %22, %24 : vector<8x32xf32>
    %c0_15 = arith.constant 0 : index
    %c0_16 = arith.constant 0 : index
    %26 = vector.load %arg8[%c0_15, %c0_16] : memref<8x32xf32, #tpu.memory_space<vmem>>, vector<8x32xf32>
    tpu.vector_store %arg8[%c0_15, %c0_16], %25 {strides = array<i32>} : memref<8x32xf32, #tpu.memory_space<vmem>>, vector<8x32xf32>,
    %c0_i32_17 = arith.constant 0 : i32
    %27 = arith.cmpi eq, %arg1, %c0_i32_17 : i32
    %28 = arith.extui %27 : i1 to i32
    %c0_i32_18 = arith.constant 0 : i32
    %29 = arith.cmpi ne, %28, %c0_i32_18 : i32
    scf.if %29 {
      %c0_19 = arith.constant 0 : index
      %c0_20 = arith.constant 0 : index
      %30 = vector.load %arg8[%c0_19, %c0_20] : memref<8x32xf32, #tpu.memory_space<vmem>>, vector<8x32xf32>
      %c0_21 = arith.constant 0 : index
      %c0_22 = arith.constant 0 : index
      %31 = vector.load %arg6[%c0_21, %c0_22] : memref<1x32xf32, #tpu.memory_space<vmem>>, vector<1x32xf32>
      %32 = vector.broadcast %31 : vector<1x32xf32> to vector<8x32xf32>
      %33 = arith.addf %30, %32 : vector<8x32xf32>
      %c0_23 = arith.constant 0 : index
      %c0_24 = arith.constant 0 : index
      %34 = vector.load %arg7[%c0_23, %c0_24] : memref<8x32xf32, #tpu.memory_space<vmem>>, vector<8x32xf32>
      tpu.vector_store %arg7[%c0_23, %c0_24], %33 {strides = array<i32>} : memref<8x32xf32, #tpu.memory_space<vmem>>, vector<8x32xf32>,
    } else {
    }
    return
  }
  func.func @transform_0(%arg0: i32, %arg1: i32) -> (i32, i32) {
    %c0_i32 = arith.constant 0 : i32
    %c0_i32_0 = arith.constant 0 : i32
    return %arg0, %c0_i32 : i32, i32
  }
  func.func @transform_1(%arg0: i32, %arg1: i32) -> (i32, i32) {
    %c0_i32 = arith.constant 0 : i32
    %c0_i32_0 = arith.constant 0 : i32
    return %c0_i32, %arg1 : i32, i32
  }
  func.func @transform_2(%arg0: i32, %arg1: i32) -> (i32, i32) {
    %c0_i32 = arith.constant 0 : i32
    %c0_i32_0 = arith.constant 0 : i32
    return %c0_i32, %arg1 : i32, i32
  }
  func.func @transform_3(%arg0: i32, %arg1: i32) -> (i32, i32) {
    %c0_i32 = arith.constant 0 : i32
    %c0_i32_0 = arith.constant 0 : i32
    return %arg1, %c0_i32 : i32, i32
  }
  func.func @transform_4(%arg0: i32, %arg1: i32) -> (i32, i32) {
    %c0_i32 = arith.constant 0 : i32
    %c0_i32_0 = arith.constant 0 : i32
    %c0_i32_1 = arith.constant 0 : i32
    return %c0_i32, %c0_i32_0 : i32, i32
  }
  func.func @transform_5(%arg0: i32, %arg1: i32) -> (i32, i32) {
    %c0_i32 = arith.constant 0 : i32
    %c0_i32_0 = arith.constant 0 : i32
    return %arg0, %c0_i32 : i32, i32
  }
}

</mosaic_0001>

<llo_original>
// kernel: tpu_custom_call.1
$region0: #{tpu_custom_call.1}
  #allocation0 [shape = 'u32[]', space=smem, size = 0x4, offset = 0x4, fixed_abs, tag = 'smem constant byte address 0x4 - core index']
  #allocation1 [shape = 'u32[72,128]{1,0:T(1,128)}', space=vmem, size = 0x9000, scoped, tag = 'internal scratch']
  #allocation2 [shape = 'f32[8,32]{1,0:T(8,128)}', space=vmem, size = 0x1000, scoped, tag = 'scratch operand']
  %s0 = inlined_call_operand.vmem [shape: f32[16,32], index: 0, kind: input, shape index: {}]
  %s1 = inlined_call_operand.vmem [shape: f32[32,128], index: 1, kind: input, shape index: {}]
  %s2 = inlined_call_operand.vmem [shape: f32[1,128], index: 2, kind: input, shape index: {}]
  %s3 = inlined_call_operand.vmem [shape: f32[128,32], index: 3, kind: input, shape index: {}]
  %s4 = inlined_call_operand.vmem [shape: f32[1,32], index: 4, kind: input, shape index: {}]
  %s5 = inlined_call_operand.hbm [shape: f32[16,32], index: 5, kind: output, shape index: {}]
  %s6 = sld [smem:[#allocation0]]
  $region61: #{tpu_custom_call.1} parent=0
    _
  %s8 = ssub.s32 1, %s6
  %s9 = scalar_select 0, %s8, %s6
  $region1: #{tpu_custom_call.1} parent=0
    #allocation3 [shape = 'u8[8192]{0}', space=vmem, size = 0x2000, scoped, tag = 'output window, operand 0']
    #allocation4 [shape = 's32[2]{0}', space=sflag, size = 0x8, scoped, tag = 'scoped memory for tpu_custom_call.1']
    %10 = vsyncpa [#allocation4], 0
    %s11 = scalar_lea.sflag [#allocation4], 1
    %12 = vsyncpa %s11, 0
    loop: start=0, step=1, limit=4
    $region2: #{tpu_custom_call.1} parent=1 // loop_pre_header
      _
    $region3: #{tpu_custom_call.1} parent=1 // loop_header
      %s14 = sphi 0, %s18
      %p15 = scmp.ge.s32.totalorder %s14, 4
      %s21 = sphi 0, %s33
      %s22 = sphi 0, %s29
      %s23 = sphi 0, %s21
      %s24 = sphi 0, %s22
      %s25 = sphi 0, %s23
      %s26 = sphi 0, %s24
      %s36 = sphi 0, %s38
      %s39 = sphi 0, %s36
      %s40 = sphi 0, %s39
      %s56 = sphi 0, %s40
      %s62 = sphi 0, %s64
      %s65 = sphi 0, %s62
      %s66 = sphi 0, %s65
      %s82 = sphi 0, %s66
      %s88 = sphi 0, %s90
      %s91 = sphi 0, %s88
      %s92 = sphi 0, %s91
      %s108 = sphi 0, %s92
      %s114 = sphi 0, %s116
      %s117 = sphi 0, %s114
      %s118 = sphi 0, %s117
      %s134 = sphi 0, %s118
      %s138 = sphi 0, %s138
      %s140 = sphi 0, %s138
      %s141 = sphi 0, %s140
      %s155 = sphi 0, %s141
      %s161 = sphi 0, %s163
      %s164 = sphi 0, %s161
      %s165 = sphi 0, %s164
      %s181 = sphi 0, %s165
    $region4: #{tpu_custom_call.1} parent=1 // loop_header_branch
      %17 = sbr.rel (%p15) target = $region8
    $region5: #{tpu_custom_call.1} parent=1 // loop_body
      %s19 = ssub.s32 %s14, 1
      %s20 = ssub.s32 %s14, 2
      %s27 = sadd.s32 1, %s22
      %p28 = scmp.ge.s32.totalorder %s27, 1
      %s29 = scalar_select %p28, 0, %s27
      %s30 = sadd.s32 1, %s21
      %s31 = scalar_select %p28, %s30, %s21
      %p32 = scmp.ge.s32.totalorder %s31, 2
      %s33 = scalar_select %p32, 0, %s31
      %s34 = ssub.s32 %s21, %s33
      %p35 = scmp.eq.s32.totalorder %s34, 0
      %s37 = sadd.s32 %s36, 1
      %s38 = scalar_select %p35, %s36, %s37
      %p41 = pneg %p35
      %p42 = scmp.eq.s32.totalorder %s14, 1
      %p43 = por %p41, %p42
      %p44 = scmp.ne.s32.totalorder %s36, %s39
      %p45 = scmp.eq.s32.totalorder %s14, 0
      %p46 = por %p44, %p45
      %p47 = scmp.ne.s32.totalorder %s36, %s39
      %p48 = scmp.eq.s32.totalorder %s19, 1
      %p49 = por %p47, %p48
      %p50 = scmp.ne.s32.totalorder %s39, %s40
      %p51 = scmp.eq.s32.totalorder %s19, 0
      %p52 = por %p50, %p51
      %p53 = scmp.ne.s32.totalorder %s39, %s40
      %p54 = scmp.eq.s32.totalorder %s20, 1
      %p55 = por %p53, %p54
      %p57 = scmp.ne.s32.totalorder %s40, %s56
      %p58 = scmp.eq.s32.totalorder %s20, 0
      %p59 = por %p57, %p58
      %s60 = ssub.s32 %s22, %s29
      %p61 = scmp.eq.s32.totalorder %s60, 0
      %s63 = sadd.s32 %s62, 1
      %s64 = scalar_select %p61, %s62, %s63
      %p67 = pneg %p61
      %p68 = scmp.eq.s32.totalorder %s14, 1
      %p69 = por %p67, %p68
      %p70 = scmp.ne.s32.totalorder %s62, %s65
      %p71 = scmp.eq.s32.totalorder %s14, 0
      %p72 = por %p70, %p71
      %p73 = scmp.ne.s32.totalorder %s62, %s65
      %p74 = scmp.eq.s32.totalorder %s19, 1
      %p75 = por %p73, %p74
      %p76 = scmp.ne.s32.totalorder %s65, %s66
      %p77 = scmp.eq.s32.totalorder %s19, 0
      %p78 = por %p76, %p77
      %p79 = scmp.ne.s32.totalorder %s65, %s66
      %p80 = scmp.eq.s32.totalorder %s20, 1
      %p81 = por %p79, %p80
      %p83 = scmp.ne.s32.totalorder %s66, %s82
      %p84 = scmp.eq.s32.totalorder %s20, 0
      %p85 = por %p83, %p84
      %s86 = ssub.s32 %s22, %s29
      %p87 = scmp.eq.s32.totalorder %s86, 0
      %s89 = sadd.s32 %s88, 1
      %s90 = scalar_select %p87, %s88, %s89
      %p93 = pneg %p87
      %p94 = scmp.eq.s32.totalorder %s14, 1
      %p95 = por %p93, %p94
      %p96 = scmp.ne.s32.totalorder %s88, %s91
      %p97 = scmp.eq.s32.totalorder %s14, 0
      %p98 = por %p96, %p97
      %p99 = scmp.ne.s32.totalorder %s88, %s91
      %p100 = scmp.eq.s32.totalorder %s19, 1
      %p101 = por %p99, %p100
      %p102 = scmp.ne.s32.totalorder %s91, %s92
      %p103 = scmp.eq.s32.totalorder %s19, 0
      %p104 = por %p102, %p103
      %p105 = scmp.ne.s32.totalorder %s91, %s92
      %p106 = scmp.eq.s32.totalorder %s20, 1
      %p107 = por %p105, %p106
      %p109 = scmp.ne.s32.totalorder %s92, %s108
      %p110 = scmp.eq.s32.totalorder %s20, 0
      %p111 = por %p109, %p110
      %s112 = ssub.s32 %s22, %s29
      %p113 = scmp.eq.s32.totalorder %s112, 0
      %s115 = sadd.s32 %s114, 1
      %s116 = scalar_select %p113, %s114, %s115
      %p119 = pneg %p113
      %p120 = scmp.eq.s32.totalorder %s14, 1
      %p121 = por %p119, %p120
      %p122 = scmp.ne.s32.totalorder %s114, %s117
      %p123 = scmp.eq.s32.totalorder %s14, 0
      %p124 = por %p122, %p123
      %p125 = scmp.ne.s32.totalorder %s114, %s117
      %p126 = scmp.eq.s32.totalorder %s19, 1
      %p127 = por %p125, %p126
      %p128 = scmp.ne.s32.totalorder %s117, %s118
      %p129 = scmp.eq.s32.totalorder %s19, 0
      %p130 = por %p128, %p129
      %p131 = scmp.ne.s32.totalorder %s117, %s118
      %p132 = scmp.eq.s32.totalorder %s20, 1
      %p133 = por %p131, %p132
      %p135 = scmp.ne.s32.totalorder %s118, %s134
      %p136 = scmp.eq.s32.totalorder %s20, 0
      %p137 = por %p135, %p136
      %s139 = sadd.s32 %s138, 1
      %p142 = scmp.eq.s32.totalorder %s14, 1
      %p143 = scmp.ne.s32.totalorder %s138, %s140
      %p144 = scmp.eq.s32.totalorder %s14, 0
      %p145 = por %p143, %p144
      %p146 = scmp.ne.s32.totalorder %s138, %s140
      %p147 = scmp.eq.s32.totalorder %s19, 1
      %p148 = por %p146, %p147
      %p149 = scmp.ne.s32.totalorder %s140, %s141
      %p150 = scmp.eq.s32.totalorder %s19, 0
      %p151 = por %p149, %p150
      %p152 = scmp.ne.s32.totalorder %s140, %s141
      %p153 = scmp.eq.s32.totalorder %s20, 1
      %p154 = por %p152, %p153
      %p156 = scmp.ne.s32.totalorder %s141, %s155
      %p157 = scmp.eq.s32.totalorder %s20, 0
      %p158 = por %p156, %p157
      %s159 = ssub.s32 %s21, %s33
      %p160 = scmp.eq.s32.totalorder %s159, 0
      %s162 = sadd.s32 %s161, 1
      %s163 = scalar_select %p160, %s161, %s162
      %p166 = pneg %p160
      %p167 = scmp.eq.s32.totalorder %s14, 1
      %p168 = por %p166, %p167
      %p169 = scmp.ne.s32.totalorder %s161, %s164
      %p170 = scmp.eq.s32.totalorder %s14, 0
      %p171 = por %p169, %p170
      %p172 = scmp.ne.s32.totalorder %s161, %s164
      %p173 = scmp.eq.s32.totalorder %s19, 1
      %p174 = por %p172, %p173
      %p175 = scmp.ne.s32.totalorder %s164, %s165
      %p176 = scmp.eq.s32.totalorder %s19, 0
      %p177 = por %p175, %p176
      %p178 = scmp.ne.s32.totalorder %s164, %s165
      %p179 = scmp.eq.s32.totalorder %s20, 1
      %p180 = por %p178, %p179
      %p182 = scmp.ne.s32.totalorder %s165, %s181
      %p183 = scmp.eq.s32.totalorder %s20, 0
      %p184 = por %p182, %p183
      %p185 = scmp.le.s32.totalorder 1, %s14
      %p186 = scmp.lt.s32.totalorder %s14, 3
      %p187 = pnand %p185, %p186
      %p188 = pneg %p187
      // Predicated region
      $region9: #{tpu_custom_call.1} parent=5 // pred_check
        _
      $region10: #{tpu_custom_call.1} parent=5 // pred_check_branch
        %190 = sbr.rel (%p187) target = $region12
      $region11: #{tpu_custom_call.1} parent=5 // pred_region
        %s191 = ssub.s32 %s14, 1
        // Predicated region
        $region13: #{tpu_custom_call.1} parent=11 // pred_check
          %p192 = pneg %p78
        $region14: #{tpu_custom_call.1} parent=11 // pred_check_branch
          %194 = sbr.rel (%p192) target = $region16
        $region15: #{tpu_custom_call.1} parent=11 // pred_region
          %p195 = scmp.lt.s32.totalorder %s24, 0
          %s196 = scalar_select %p195, %s24, 0
          %s197 = smul.addr %s196, 8
          %s198 = scalar_lea.vmem %s1, %s197
        $region16: #{tpu_custom_call.1} parent=11 // pred_fallthru
          _
        // Predicated region
        $region17: #{tpu_custom_call.1} parent=11 // pred_check
          %p199 = pneg %p104
        $region18: #{tpu_custom_call.1} parent=11 // pred_check_branch
          %201 = sbr.rel (%p199) target = $region20
        $region19: #{tpu_custom_call.1} parent=11 // pred_region
          %p202 = scmp.lt.s32.totalorder %s24, 0
          %s203 = scalar_select %p202, %s24, 0
          %s204 = scalar_lea.vmem %s2, %s203
        $region20: #{tpu_custom_call.1} parent=11 // pred_fallthru
          _
        // Predicated region
        $region21: #{tpu_custom_call.1} parent=11 // pred_check
          %p205 = pneg %p130
        $region22: #{tpu_custom_call.1} parent=11 // pred_check_branch
          %207 = sbr.rel (%p205) target = $region24
        $region23: #{tpu_custom_call.1} parent=11 // pred_region
          %s208 = smul.u32 16, %s24
          %p209 = scmp.lt.s32.totalorder %s208, 15
          %s210 = scalar_select %p209, %s208, 15
          %s211 = smul.addr %s210, 8
          %s212 = scalar_lea.vmem %s3, %s211
          %s213 = smul.u32 16, %s24
        $region24: #{tpu_custom_call.1} parent=11 // pred_fallthru
          _
        // Predicated region
        $region25: #{tpu_custom_call.1} parent=11 // pred_check
          %p214 = pneg %p151
        $region26: #{tpu_custom_call.1} parent=11 // pred_check_branch
          %216 = sbr.rel (%p214) target = $region28
        $region27: #{tpu_custom_call.1} parent=11 // pred_region
          _
        $region28: #{tpu_custom_call.1} parent=11 // pred_fallthru
          _
      $region12: #{tpu_custom_call.1} parent=5 // pred_fallthru
        _
      %p217 = scmp.lt.s32.totalorder %s14, 2
      // Predicated region
      $region29: #{tpu_custom_call.1} parent=5 // pred_check
        %p218 = pneg %p217
      $region30: #{tpu_custom_call.1} parent=5 // pred_check_branch
        %220 = sbr.rel (%p218) target = $region32
      $region31: #{tpu_custom_call.1} parent=5 // pred_region
        // Predicated region
        $region33: #{tpu_custom_call.1} parent=31 // pred_check
          %p221 = pneg %p46
        $region34: #{tpu_custom_call.1} parent=31 // pred_check_branch
          %223 = sbr.rel (%p221) target = $region36
        $region35: #{tpu_custom_call.1} parent=31 // pred_region
          %p224 = scmp.lt.s32.totalorder %s21, 1
          %s225 = scalar_select %p224, %s21, 1
          %s226 = smul.addr %s225, 8
          %s227 = scalar_lea.vmem %s0, %s226
        $region36: #{tpu_custom_call.1} parent=31 // pred_fallthru
          _
      $region32: #{tpu_custom_call.1} parent=5 // pred_fallthru
        _
      %p228 = scmp.le.s32.totalorder 1, %s14
      %p229 = scmp.lt.s32.totalorder %s14, 3
      %p230 = pnand %p228, %p229
      %p231 = pneg %p230
      // Predicated region
      $region37: #{tpu_custom_call.1} parent=5 // pred_check
        _
      $region38: #{tpu_custom_call.1} parent=5 // pred_check_branch
        %233 = sbr.rel (%p230) target = $region40
      $region39: #{tpu_custom_call.1} parent=5 // pred_region
        %s234 = ssub.s32 %s14, 1
        %p235 = scmp.lt.s32.totalorder %s23, 1
        %s236 = scalar_select %p235, %s23, 1
        %s237 = smul.addr %s236, 8
        %s238 = scalar_lea.vmem %s0, %s237
        %p239 = pneg %p52
        %p240 = pneg %p49
        %p241 = scmp.lt.s32.totalorder %s24, 0
        %s242 = scalar_select %p241, %s24, 0
        %s243 = smul.addr %s242, 8
        %s244 = scalar_lea.vmem %s1, %s243
        %p245 = pneg %p78
        %p246 = pneg %p75
        %p247 = scmp.lt.s32.totalorder %s24, 0
        %s248 = scalar_select %p247, %s24, 0
        %s249 = scalar_lea.vmem %s2, %s248
        %p250 = pneg %p104
        %p251 = pneg %p101
        %s252 = smul.u32 16, %s24
        %p253 = scmp.lt.s32.totalorder %s252, 15
        %s254 = scalar_select %p253, %s252, 15
        %s255 = smul.addr %s254, 8
        %s256 = scalar_lea.vmem %s3, %s255
        %p257 = pneg %p130
        %p258 = pneg %p127
        %p259 = pneg %p151
        %p260 = pneg %p148
        %p261 = pneg %p177
        %p262 = pneg %p174
        %s263 = sand.u32 %s164, 1
        %s264 = scalar_lea.sflag [#allocation4], %s263
        %s265 = sand.u32 %s164, 1
        %s266 = smul.addr %s265, 8
        %s267 = scalar_lea.vmem [#allocation3], %s266
        %p268 = scmp.lt.s32.totalorder %s23, 1
        %s269 = scalar_select %p268, %s23, 1
        %s270 = smul.addr %s269, 8
        %s271 = scalar_lea.vmem %s0, %s270
        %p272 = scmp.lt.s32.totalorder %s24, 0
        %s273 = scalar_select %p272, %s24, 0
        %s274 = smul.addr %s273, 8
        %s275 = scalar_lea.vmem %s1, %s274
        %p276 = scmp.lt.s32.totalorder %s24, 0
        %s277 = scalar_select %p276, %s24, 0
        %s278 = scalar_lea.vmem %s2, %s277
        %s279 = smul.u32 16, %s24
        %p280 = scmp.lt.s32.totalorder %s279, 15
        %s281 = scalar_select %p280, %s279, 15
        %s282 = smul.addr %s281, 8
        %s283 = scalar_lea.vmem %s3, %s282
        %s284 = smul.u32 16, %s24
        %p285 = scmp.eq.s32.totalorder %s24, 0
        // Predicated region
        $region41: #{tpu_custom_call.1} parent=39 // pred_check
          %p286 = pneg %p285
        $region42: #{tpu_custom_call.1} parent=39 // pred_check_branch
          %288 = sbr.rel (%p286) target = $region44
        $region43: #{tpu_custom_call.1} parent=39 // pred_region
          %vm289 = vcmask 261120
          %290 = vst.msk [vmem:[#allocation2] sm:$0xff] %vm289, 0.0
        $region44: #{tpu_custom_call.1} parent=39 // pred_fallthru
          _
        %v291 = vld [vmem:[%s271] sm:$0xff]
        %v292 = vld [vmem:[%s275] sm:$0xff]
        %v293 = vld [vmem:[%s275 + $0x8] sm:$0xff]
        %v294 = vld [vmem:[%s275 + $0x10] sm:$0xff]
        %v295 = vld [vmem:[%s275 + $0x18] sm:$0xff]
        %v296 = vld [vmem:[%s278] sm:$0x1]
        %v298 = vperm.slane %v296, 0
        %vm300 = vcmask 261120
        %v302 = vsel %vm300, %v291, 0
        %304 = vmatpush.msra.mxu0 0.0
        %305 = vmatpush.msra.mxu0 0.0
        %306 = vmatpush.msra.mxu0 0.0
        %307 = vmatpush.msra.mxu0 0.0
        %308 = vmatpush.msra.mxu0 0.0
        %309 = vmatpush.msra.mxu0 0.0
        %310 = vmatpush.msra.mxu0 0.0
        %311 = vmatpush.msra.mxu0 0.0
        %312 = vmatpush.msra.mxu0 0.0
        %313 = vmatpush.msra.mxu0 0.0
        %314 = vmatpush.msra.mxu0 0.0
        %315 = vmatpush.msra.mxu0 0.0
        %316 = vmatpush.msra.mxu0 %v295
        %317 = vmatpush.msra.mxu0 %v294
        %318 = vmatpush.msra.mxu0 %v293
        %319 = vmatpush.msra.mxu0 %v292
        %320 = vmatmul.f32.gmra.mxu0 %v302
        %v321 = vpop.f32.mrf.mxu0
        %v322 = vadd.f32 %v298, %v321
        %323 = vdwg.mxu0
        %v324 = vmul.f32 %v322, 0.5
        %v325 = vmul.f32 %v322, 0.044715
        %v326 = vmul.f32 %v325, %v322
        %v327 = vmul.f32 %v326, %v322
        %v328 = vadd.f32 %v322, %v327
        %v329 = vmul.f32 %v328, 0.7978846
        %v330 = vtanh.pop %v329
        %v331 = vadd.f32 %v330, 1.0
        %v332 = vmul.f32 %v324, %v331
        %v333 = vld [vmem:[#allocation2] sm:$0xff]
        %v334 = vld [vmem:[%s283] sm:$0xff]
        %v335 = vld [vmem:[%s283 + $0x8] sm:$0xff]
        %v336 = vld [vmem:[%s283 + $0x10] sm:$0xff]
        %v337 = vld [vmem:[%s283 + $0x18] sm:$0xff]
        %v338 = vld [vmem:[%s283 + $0x20] sm:$0xff]
        %v339 = vld [vmem:[%s283 + $0x28] sm:$0xff]
        %v340 = vld [vmem:[%s283 + $0x30] sm:$0xff]
        %v341 = vld [vmem:[%s283 + $0x38] sm:$0xff]
        %v342 = vld [vmem:[%s283 + $0x40] sm:$0xff]
        %v343 = vld [vmem:[%s283 + $0x48] sm:$0xff]
        %v344 = vld [vmem:[%s283 + $0x50] sm:$0xff]
        %v345 = vld [vmem:[%s283 + $0x58] sm:$0xff]
        %v346 = vld [vmem:[%s283 + $0x60] sm:$0xff]
        %v347 = vld [vmem:[%s283 + $0x68] sm:$0xff]
        %v348 = vld [vmem:[%s283 + $0x70] sm:$0xff]
        %v349 = vld [vmem:[%s283 + $0x78] sm:$0xff]
        %350 = vmatpush.msra.mxu0 %v349
        %351 = vmatpush.msra.mxu0 %v348
        %352 = vmatpush.msra.mxu0 %v347
        %353 = vmatpush.msra.mxu0 %v346
        %354 = vmatpush.msra.mxu0 %v345
        %355 = vmatpush.msra.mxu0 %v344
        %356 = vmatpush.msra.mxu0 %v343
        %357 = vmatpush.msra.mxu0 %v342
        %358 = vmatpush.msra.mxu0 %v341
        %359 = vmatpush.msra.mxu0 %v340
        %360 = vmatpush.msra.mxu0 %v339
        %361 = vmatpush.msra.mxu0 %v338
        %362 = vmatpush.msra.mxu0 %v337
        %363 = vmatpush.msra.mxu0 %v336
        %364 = vmatpush.msra.mxu0 %v335
        %365 = vmatpush.msra.mxu0 %v334
        %366 = vmatmul.f32.gmra.mxu0 %v332
        %v367 = vpop.f32.mrf.mxu0
        %v368 = vadd.f32 0.0, %v367
        %369 = vdwg.mxu0
        %v370 = vadd.f32 %v333, %v368
        %371 = vst.msk [vmem:[#allocation2] sm:$0xff] %vm300, %v370
        // Predicated region
        $region45: #{tpu_custom_call.1} parent=39 // pred_check
          %p372 = pneg %p285
        $region46: #{tpu_custom_call.1} parent=39 // pred_check_branch
          %374 = sbr.rel (%p372) target = $region48
        $region47: #{tpu_custom_call.1} parent=39 // pred_region
          %v375 = vld [vmem:[#allocation2] sm:$0xff]
          %v376 = vld [vmem:[%s4] sm:$0x1]
          %v378 = vperm.slane %v376, 0
          %v380 = vadd.f32 %v375, %v378
          %381 = vst.msk [vmem:[%s267] sm:$0xff] %vm300, %v380
        $region48: #{tpu_custom_call.1} parent=39 // pred_fallthru
          _
        %s382 = sand.u32 %s164, 1
        %s383 = scalar_lea.sflag [#allocation4], %s382
        %s384 = sand.u32 %s164, 1
        %s385 = smul.addr %s384, 8
        %s386 = scalar_lea.vmem [#allocation3], %s385
        // Predicated region
        $region49: #{tpu_custom_call.1} parent=39 // pred_check
          %p387 = pneg %p174
        $region50: #{tpu_custom_call.1} parent=39 // pred_check_branch
          %389 = sbr.rel (%p387) target = $region52
        $region51: #{tpu_custom_call.1} parent=39 // pred_region
          %391 = vsyncadd %s383, 0
          %s392 = smul.addr %s23, 8
          %s393 = scalar_lea.hbm %s5, %s392
          %s395 = sshll.u32 %s386, 4
          %s396 = int_to_ptr.vmem [resolvable:$true] %s395
          %s397 = sshll.u32 %s393, 4
          %s398 = int_to_ptr.hbm [resolvable:$true] %s397
          %400 = dma.vmem_to_hbm [thread:$0]  %s396, 128, %s398, %s383
        $region52: #{tpu_custom_call.1} parent=39 // pred_fallthru
          _
      $region40: #{tpu_custom_call.1} parent=5 // pred_fallthru
        _
      %p401 = scmp.le.s32.totalorder 2, %s14
      // Predicated region
      $region53: #{tpu_custom_call.1} parent=5 // pred_check
        %p402 = pneg %p401
      $region54: #{tpu_custom_call.1} parent=5 // pred_check_branch
        %404 = sbr.rel (%p402) target = $region56
      $region55: #{tpu_custom_call.1} parent=5 // pred_region
        %s405 = ssub.s32 %s14, 2
        // Predicated region
        $region57: #{tpu_custom_call.1} parent=55 // pred_check
          %p406 = pneg %p180
        $region58: #{tpu_custom_call.1} parent=55 // pred_check_branch
          %408 = sbr.rel (%p406) target = $region60
        $region59: #{tpu_custom_call.1} parent=55 // pred_region
          %s409 = sand.u32 %s165, 1
          %s410 = scalar_lea.sflag [#allocation4], %s409
          %s411 = sand.u32 %s165, 1
          %s412 = smul.addr %s411, 8
          %s413 = scalar_lea.vmem [#allocation3], %s412
          %415 = dma.done %s410, 128
        $region60: #{tpu_custom_call.1} parent=55 // pred_fallthru
          _
      $region56: #{tpu_custom_call.1} parent=5 // pred_fallthru
        _
    $region6: #{tpu_custom_call.1} parent=1 // loop_footer
      %s18 = sadd.s32 1, %s14
    $region7: #{tpu_custom_call.1} parent=1 // loop_footer_branch
      %13 = sbr.rel target = $region3
    $region8: #{tpu_custom_call.1} parent=1 // loop_exit
      _
    %416 = vsyncpa [#allocation4], 1
    %s417 = scalar_lea.sflag [#allocation4], 1
    %418 = vsyncpa %s417, 1

</llo_original>
